<compile_context>
chip_gen: v5e
topology: v5e:2x2
jax: 0.10.0
libtpu: 0.0.40
codegen_flags: <defaults>
</compile_context>

<pallas_src>
import jax
import jax.numpy as jnp
from jax.experimental import pallas as pl
from jax.experimental.pallas import tpu as pltpu

SEQ = 10                 # fixed by the module (nn.Embedding(10, 768), arange(10))
HID = 768
LN_EPS = 1e-12
ROW_ALIGN = 40           # lcm(8 sublanes, SEQ=10): dense vregs + pos-pattern alignment
BLOCK_ROWS = 960         # 960*768*4 = 2.95 MB per buffer; comfortable on all chips


def posemb_ln_kernel(x_ref, pos_ref, gamma_ref, beta_ref, o_ref):
    # x_ref:     (br, HID)   flattened word-embedding rows
    # pos_ref:   (br, HID)   pre-tiled position embeddings (same shape as x)
    # gamma_ref: (1, HID)    LayerNorm.weight
    # beta_ref:  (1, HID)    LayerNorm.bias
    x = x_ref[...] + pos_ref[...]                               # same-shape add, no broadcast

    inv_h = jnp.float32(1.0 / HID)
    u = jnp.sum(x, axis=-1, keepdims=True) * inv_h              # (br, 1)
    d = x - u
    var = jnp.sum(d * d, axis=-1, keepdims=True) * inv_h        # biased variance (two-pass)
    inv = jax.lax.rsqrt(var + LN_EPS)

    o_ref[...] = gamma_ref[...] * (d * inv) + beta_ref[...]
    # TODO(synk): dropout(p=0.1) is identity in eval mode; no RNG mask applied here.


def _pick_block_rows(total_rows, block_rows):
    """Row tile: multiple of ROW_ALIGN, >=2 grid steps when possible (v7x megacore)."""
    if total_rows < 2 * ROW_ALIGN:
        return total_rows                       # tiny problem -> single full-array block
    br = min(block_rows, (total_rows // 2 // ROW_ALIGN) * ROW_ALIGN)
    return max(br, ROW_ALIGN)


def position_embeddings_forward(words, pos_table, gamma, beta, *, block_rows=BLOCK_ROWS):
    """words: (B, SEQ, HID) float32 -> (B, SEQ, HID) float32."""
    B = words.shape[0]
    total_rows = B * SEQ
    x2d = words.reshape(total_rows, HID)        # free, contiguous reshape

    br = _pick_block_rows(total_rows, block_rows)
    grid = (pl.cdiv(total_rows, br),)

    # Pre-tile the (SEQ, HID) table to one row-block; built once, VMEM-resident.
    # br is always a multiple of SEQ (total_rows = B*SEQ when br == total_rows,
    # otherwise br is a multiple of ROW_ALIGN = 4*SEQ).
    pos_tiled = jnp.tile(pos_table, (br // SEQ, 1))             # (br, HID)

    # gamma / beta arrive as (HID,); present them lane-dense as (1, HID).
    gamma2 = gamma.reshape(1, HID)
    beta2 = beta.reshape(1, HID)

    out2d = pl.pallas_call(
        posemb_ln_kernel,
        out_shape=jax.ShapeDtypeStruct((total_rows, HID), words.dtype),
        grid_spec=pltpu.PrefetchScalarGridSpec(
            num_scalar_prefetch=0,
            grid=grid,
            in_specs=[
                pl.BlockSpec((br, HID), lambda i: (i, 0)),      # activation row-tile
                pl.BlockSpec((br, HID), lambda i: (0, 0)),      # tiled pos (resident)
                pl.BlockSpec((1, HID), lambda i: (0, 0)),       # gamma (resident)
                pl.BlockSpec((1, HID), lambda i: (0, 0)),       # beta (resident)
            ],
            out_specs=pl.BlockSpec((br, HID), lambda i: (i, 0)),
        ),
        compiler_params=pltpu.CompilerParams(
            dimension_semantics=("parallel",),
            vmem_limit_bytes=32 * 1024 * 1024,
        ),
    )(x2d, pos_tiled, gamma2, beta2)

    return out2d.reshape(B, SEQ, HID)


def reference_forward(words, pos_table, gamma, beta):
    x = words + pos_table[None]
    u = jnp.mean(x, axis=-1, keepdims=True)
    s = jnp.mean((x - u) ** 2, axis=-1, keepdims=True)
    x = (x - u) / jnp.sqrt(s + LN_EPS)
    return gamma * x + beta


if __name__ == "__main__":
    key = jax.random.PRNGKey(0)
    k_words, k_pos = jax.random.split(key)

    B = 2
    # words_embeddings: (B, 10, 768)
    words = jax.random.normal(k_words, (B, SEQ, HID), dtype=jnp.float32)

    # Deterministic parameter init (mirrors nn.Embedding / BertLayerNorm shapes):
    pos_table = 0.02 * jax.random.normal(k_pos, (SEQ, HID), dtype=jnp.float32)
    gamma = jnp.ones((HID,), dtype=jnp.float32)    # LayerNorm.weight
    beta = jnp.zeros((HID,), dtype=jnp.float32)    # LayerNorm.bias

    out = position_embeddings_forward(words, pos_table, gamma, beta)
    out = jax.block_until_ready(out)

    ref = reference_forward(words, pos_table, gamma, beta)
    assert out.shape == (B, SEQ, HID)
    assert jnp.allclose(out, ref, atol=1e-5, rtol=1e-5), "mismatch vs reference"

    print("KERNEL_OK")
</pallas_src>

<mosaic_0001>
module attributes {stable_mosaic.version = 11 : i64} {
  func.func @posemb_ln_kernel(%arg0: i32, %arg1: memref<20x768xf32, #tpu.memory_space<vmem>>, %arg2: memref<20x768xf32, #tpu.memory_space<vmem>>, %arg3: memref<1x768xf32, #tpu.memory_space<vmem>>, %arg4: memref<1x768xf32, #tpu.memory_space<vmem>>, %arg5: memref<20x768xf32, #tpu.memory_space<vmem>>) attributes {dimension_semantics = [#tpu.dimension_semantics<parallel>], iteration_bounds = array<i64: 1>, scalar_prefetch = 0 : i64, scratch_operands = 0 : i64, tpu.core_type = #tpu.core_type<tc>, window_params = [{transform_indices = @transform_0, window_bounds = array<i64: 20, 768>}, {pipeline_mode = #tpu.pipeline_mode<synchronous>, transform_indices = @transform_1, window_bounds = array<i64: 20, 768>}, {pipeline_mode = #tpu.pipeline_mode<synchronous>, transform_indices = @transform_2, window_bounds = array<i64: 1, 768>}, {pipeline_mode = #tpu.pipeline_mode<synchronous>, transform_indices = @transform_3, window_bounds = array<i64: 1, 768>}, {transform_indices = @transform_4, window_bounds = array<i64: 20, 768>}]} {
    %c0 = arith.constant 0 : index
    %c0_0 = arith.constant 0 : index
    %0 = vector.load %arg1[%c0, %c0_0] : memref<20x768xf32, #tpu.memory_space<vmem>>, vector<20x768xf32>
    %c0_1 = arith.constant 0 : index
    %c0_2 = arith.constant 0 : index
    %1 = vector.load %arg2[%c0_1, %c0_2] : memref<20x768xf32, #tpu.memory_space<vmem>>, vector<20x768xf32>
    %2 = arith.addf %0, %1 : vector<20x768xf32>
    %cst = arith.constant dense<0.000000e+00> : vector<20xf32>
    %3 = vector.multi_reduction <add>, %2, %cst [1] : vector<20x768xf32> to vector<20xf32>
    %4 = vector.shape_cast %3 : vector<20xf32> to vector<20x1xf32>
    %cst_3 = arith.constant 0.00130208337 : f32
    %5 = vector.broadcast %cst_3 : f32 to vector<20x1xf32>
    %6 = arith.mulf %4, %5 : vector<20x1xf32>
    %7 = vector.broadcast %6 : vector<20x1xf32> to vector<20x768xf32>
    %8 = arith.subf %2, %7 : vector<20x768xf32>
    %9 = arith.mulf %8, %8 : vector<20x768xf32>
    %cst_4 = arith.constant dense<0.000000e+00> : vector<20xf32>
    %10 = vector.multi_reduction <add>, %9, %cst_4 [1] : vector<20x768xf32> to vector<20xf32>
    %11 = vector.shape_cast %10 : vector<20xf32> to vector<20x1xf32>
    %cst_5 = arith.constant 0.00130208337 : f32
    %12 = vector.broadcast %cst_5 : f32 to vector<20x1xf32>
    %13 = arith.mulf %11, %12 : vector<20x1xf32>
    %cst_6 = arith.constant 9.99999996E-13 : f32
    %14 = vector.broadcast %cst_6 : f32 to vector<20x1xf32>
    %15 = arith.addf %13, %14 : vector<20x1xf32>
    %16 = math.rsqrt %15 : vector<20x1xf32>
    %c0_7 = arith.constant 0 : index
    %c0_8 = arith.constant 0 : index
    %17 = vector.load %arg3[%c0_7, %c0_8] : memref<1x768xf32, #tpu.memory_space<vmem>>, vector<1x768xf32>
    %18 = vector.broadcast %16 : vector<20x1xf32> to vector<20x768xf32>
    %19 = arith.mulf %8, %18 : vector<20x768xf32>
    %20 = vector.broadcast %17 : vector<1x768xf32> to vector<20x768xf32>
    %21 = arith.mulf %20, %19 : vector<20x768xf32>
    %c0_9 = arith.constant 0 : index
    %c0_10 = arith.constant 0 : index
    %22 = vector.load %arg4[%c0_9, %c0_10] : memref<1x768xf32, #tpu.memory_space<vmem>>, vector<1x768xf32>
    %23 = vector.broadcast %22 : vector<1x768xf32> to vector<20x768xf32>
    %24 = arith.addf %21, %23 : vector<20x768xf32>
    %c0_11 = arith.constant 0 : index
    %c0_12 = arith.constant 0 : index
    %25 = vector.load %arg5[%c0_11, %c0_12] : memref<20x768xf32, #tpu.memory_space<vmem>>, vector<20x768xf32>
    tpu.vector_store %arg5[%c0_11, %c0_12], %24 {strides = array<i32>} : memref<20x768xf32, #tpu.memory_space<vmem>>, vector<20x768xf32>,
    return
  }
  func.func @transform_0(%arg0: i32) -> (i32, i32) {
    %c0_i32 = arith.constant 0 : i32
    %c0_i32_0 = arith.constant 0 : i32
    return %arg0, %c0_i32 : i32, i32
  }
  func.func @transform_1(%arg0: i32) -> (i32, i32) {
    %c0_i32 = arith.constant 0 : i32
    %c0_i32_0 = arith.constant 0 : i32
    %c0_i32_1 = arith.constant 0 : i32
    return %c0_i32, %c0_i32_0 : i32, i32
  }
  func.func @transform_2(%arg0: i32) -> (i32, i32) {
    %c0_i32 = arith.constant 0 : i32
    %c0_i32_0 = arith.constant 0 : i32
    %c0_i32_1 = arith.constant 0 : i32
    return %c0_i32, %c0_i32_0 : i32, i32
  }
  func.func @transform_3(%arg0: i32) -> (i32, i32) {
    %c0_i32 = arith.constant 0 : i32
    %c0_i32_0 = arith.constant 0 : i32
    %c0_i32_1 = arith.constant 0 : i32
    return %c0_i32, %c0_i32_0 : i32, i32
  }
  func.func @transform_4(%arg0: i32) -> (i32, i32) {
    %c0_i32 = arith.constant 0 : i32
    %c0_i32_0 = arith.constant 0 : i32
    return %arg0, %c0_i32 : i32, i32
  }
}

</mosaic_0001>

<llo_original>
// kernel: tpu_custom_call.1
$region0: #{tpu_custom_call.1}
  #allocation0 [shape = 'u32[]', space=smem, size = 0x4, offset = 0x4, fixed_abs, tag = 'smem constant byte address 0x4 - core index']
  #allocation1 [shape = 'u32[72,128]{1,0:T(1,128)}', space=vmem, size = 0x9000, scoped, tag = 'internal scratch']
  %s0 = inlined_call_operand.hbm [shape: f32[20,768], index: 0, kind: input, shape index: {}]
  %s1 = inlined_call_operand.hbm [shape: f32[20,768], index: 1, kind: input, shape index: {}]
  %s2 = inlined_call_operand.hbm [shape: f32[1,768], index: 2, kind: input, shape index: {}]
  %s3 = inlined_call_operand.hbm [shape: f32[1,768], index: 3, kind: input, shape index: {}]
  %s4 = inlined_call_operand.hbm [shape: f32[20,768], index: 4, kind: output, shape index: {}]
  %s5 = sld [smem:[#allocation0]]
  $region42: #{tpu_custom_call.1} parent=0
    _
  %s7 = ssub.s32 1, %s5
  %s8 = scalar_select 0, %s7, %s5
  $region1: #{tpu_custom_call.1} parent=0
    #allocation2 [shape = 'u8[73728]{0}', space=vmem, size = 0x12000, scoped, tag = 'input window, operand 0, single buffered']
    #allocation3 [shape = 's32[1]{0}', space=sflag, size = 0x4, scoped, tag = 'scoped memory for tpu_custom_call.1']
    #allocation4 [shape = 's32[1]{0}', space=sflag, size = 0x4, scoped, tag = 'scoped memory for tpu_custom_call.1']
    #allocation5 [shape = 'u8[73728]{0}', space=vmem, size = 0x12000, scoped, tag = 'input window, operand 1, single buffered']
    #allocation6 [shape = 's32[1]{0}', space=sflag, size = 0x4, scoped, tag = 'scoped memory for tpu_custom_call.1']
    #allocation7 [shape = 'u8[3072]{0}', space=vmem, size = 0xc00, scoped, tag = 'input window, operand 2, single buffered']
    #allocation8 [shape = 'u8[3072]{0}', space=vmem, size = 0xc00, scoped, tag = 'input window, operand 3, single buffered']
    #allocation9 [shape = 's32[1]{0}', space=sflag, size = 0x4, scoped, tag = 'scoped memory for tpu_custom_call.1']
    #allocation10 [shape = 'u8[73728]{0}', space=vmem, size = 0x12000, scoped, tag = 'output window, operand 0, single buffered']
    %9 = vsyncpa [#allocation3], 0
    %10 = vsyncpa [#allocation6], 0
    %11 = vsyncpa [#allocation9], 0
    %12 = vsyncpa [#allocation4], 0
    // Predicated region
    $region2: #{tpu_custom_call.1} parent=1 // pred_check
      _
    $region3: #{tpu_custom_call.1} parent=1 // pred_check_branch
      %14 = sbr.rel (0) target = $region5
    $region4: #{tpu_custom_call.1} parent=1 // pred_region
      %16 = vsyncadd [#allocation3], 0
      %s17 = sshll.u32 %s0, 4
      %s18 = int_to_ptr.hbm [resolvable:$true] %s17
      %s19 = sshll.u32 [#allocation2], 4
      %s20 = int_to_ptr.vmem [resolvable:$true] %s19
      %25 = dma.hbm_to_vmem [thread:$0]  %s18, 2304, %s20, [#allocation3], 768, 768, 48
    $region5: #{tpu_custom_call.1} parent=1 // pred_fallthru
      _
    // Predicated region
    $region6: #{tpu_custom_call.1} parent=1 // pred_check
      _
    $region7: #{tpu_custom_call.1} parent=1 // pred_check_branch
      %27 = sbr.rel (0) target = $region9
    $region8: #{tpu_custom_call.1} parent=1 // pred_region
      %29 = vsyncadd [#allocation6], 0
      %s30 = sshll.u32 %s1, 4
      %s31 = int_to_ptr.hbm [resolvable:$true] %s30
      %s32 = sshll.u32 [#allocation5], 4
      %s33 = int_to_ptr.vmem [resolvable:$true] %s32
      %38 = dma.hbm_to_vmem [thread:$0]  %s31, 2304, %s33, [#allocation6], 768, 768, 48
    $region9: #{tpu_custom_call.1} parent=1 // pred_fallthru
      _
    // Predicated region
    $region10: #{tpu_custom_call.1} parent=1 // pred_check
      _
    $region11: #{tpu_custom_call.1} parent=1 // pred_check_branch
      %40 = sbr.rel (0) target = $region13
    $region12: #{tpu_custom_call.1} parent=1 // pred_region
      %42 = vsyncadd [#allocation6], 0
      %s44 = sshll.u32 %s2, 4
      %s45 = int_to_ptr.hbm [resolvable:$true] %s44
      %s46 = sshll.u32 [#allocation7], 4
      %s47 = int_to_ptr.vmem [resolvable:$true] %s46
      %49 = dma.hbm_to_vmem [thread:$0]  %s45, 96, %s47, [#allocation6]
    $region13: #{tpu_custom_call.1} parent=1 // pred_fallthru
      _
    // Predicated region
    $region14: #{tpu_custom_call.1} parent=1 // pred_check
      _
    $region15: #{tpu_custom_call.1} parent=1 // pred_check_branch
      %51 = sbr.rel (0) target = $region17
    $region16: #{tpu_custom_call.1} parent=1 // pred_region
      %53 = vsyncadd [#allocation9], 0
      %s55 = sshll.u32 %s3, 4
      %s56 = int_to_ptr.hbm [resolvable:$true] %s55
      %s57 = sshll.u32 [#allocation8], 4
      %s58 = int_to_ptr.vmem [resolvable:$true] %s57
      %60 = dma.hbm_to_vmem [thread:$0]  %s56, 96, %s58, [#allocation9]
    $region17: #{tpu_custom_call.1} parent=1 // pred_fallthru
      _
    // Predicated region
    $region18: #{tpu_custom_call.1} parent=1 // pred_check
      _
    $region19: #{tpu_custom_call.1} parent=1 // pred_check_branch
      %62 = sbr.rel (0) target = $region21
    $region20: #{tpu_custom_call.1} parent=1 // pred_region
      %64 = dma.done [#allocation3], 2304
    $region21: #{tpu_custom_call.1} parent=1 // pred_fallthru
      _
    // Predicated region
    $region22: #{tpu_custom_call.1} parent=1 // pred_check
      _
    $region23: #{tpu_custom_call.1} parent=1 // pred_check_branch
      %66 = sbr.rel (0) target = $region25
    $region24: #{tpu_custom_call.1} parent=1 // pred_region
      %68 = dma.done [#allocation6], 2304
    $region25: #{tpu_custom_call.1} parent=1 // pred_fallthru
      _
    // Predicated region
    $region26: #{tpu_custom_call.1} parent=1 // pred_check
      _
    $region27: #{tpu_custom_call.1} parent=1 // pred_check_branch
      %70 = sbr.rel (0) target = $region29
    $region28: #{tpu_custom_call.1} parent=1 // pred_region
      %72 = dma.done [#allocation6], 96
    $region29: #{tpu_custom_call.1} parent=1 // pred_fallthru
      _
    // Predicated region
    $region30: #{tpu_custom_call.1} parent=1 // pred_check
      _
    $region31: #{tpu_custom_call.1} parent=1 // pred_check_branch
      %74 = sbr.rel (0) target = $region33
    $region32: #{tpu_custom_call.1} parent=1 // pred_region
      %76 = dma.done [#allocation9], 96
    $region33: #{tpu_custom_call.1} parent=1 // pred_fallthru
      _
    %v77 = vld [vmem:[#allocation2] sm:$0xff]
    %v78 = vld [vmem:[#allocation2 + $0x8] sm:$0xff]
    %v79 = vld [vmem:[#allocation2 + $0x10] sm:$0xff]
    %v80 = vld [vmem:[#allocation2 + $0x18] sm:$0xff]
    %v81 = vld [vmem:[#allocation2 + $0x20] sm:$0xff]
    %v82 = vld [vmem:[#allocation2 + $0x28] sm:$0xff]
    %v83 = vld [vmem:[#allocation2 + $0x30] sm:$0xff]
    %v84 = vld [vmem:[#allocation2 + $0x38] sm:$0xff]
    %v85 = vld [vmem:[#allocation2 + $0x40] sm:$0xff]
    %v86 = vld [vmem:[#allocation2 + $0x48] sm:$0xff]
    %v87 = vld [vmem:[#allocation2 + $0x50] sm:$0xff]
    %v88 = vld [vmem:[#allocation2 + $0x58] sm:$0xff]
    %v89 = vld [vmem:[#allocation2 + $0x60] sm:$0xf]
    %v90 = vld [vmem:[#allocation2 + $0x68] sm:$0xf]
    %v91 = vld [vmem:[#allocation2 + $0x70] sm:$0xf]
    %v92 = vld [vmem:[#allocation2 + $0x78] sm:$0xf]
    %v93 = vld [vmem:[#allocation2 + $0x80] sm:$0xf]
    %v94 = vld [vmem:[#allocation2 + $0x88] sm:$0xf]
    %v95 = vld [vmem:[#allocation5] sm:$0xff]
    %v96 = vld [vmem:[#allocation5 + $0x8] sm:$0xff]
    %v97 = vld [vmem:[#allocation5 + $0x10] sm:$0xff]
    %v98 = vld [vmem:[#allocation5 + $0x18] sm:$0xff]
    %v99 = vld [vmem:[#allocation5 + $0x20] sm:$0xff]
    %v100 = vld [vmem:[#allocation5 + $0x28] sm:$0xff]
    %v101 = vld [vmem:[#allocation5 + $0x30] sm:$0xff]
    %v102 = vld [vmem:[#allocation5 + $0x38] sm:$0xff]
    %v103 = vld [vmem:[#allocation5 + $0x40] sm:$0xff]
    %v104 = vld [vmem:[#allocation5 + $0x48] sm:$0xff]
    %v105 = vld [vmem:[#allocation5 + $0x50] sm:$0xff]
    %v106 = vld [vmem:[#allocation5 + $0x58] sm:$0xff]
    %v107 = vld [vmem:[#allocation5 + $0x60] sm:$0xf]
    %v108 = vld [vmem:[#allocation5 + $0x68] sm:$0xf]
    %v109 = vld [vmem:[#allocation5 + $0x70] sm:$0xf]
    %v110 = vld [vmem:[#allocation5 + $0x78] sm:$0xf]
    %v111 = vld [vmem:[#allocation5 + $0x80] sm:$0xf]
    %v112 = vld [vmem:[#allocation5 + $0x88] sm:$0xf]
    %v113 = vadd.f32 %v77, %v95
    %v114 = vadd.f32 %v78, %v96
    %v115 = vadd.f32 %v79, %v97
    %v116 = vadd.f32 %v80, %v98
    %v117 = vadd.f32 %v81, %v99
    %v118 = vadd.f32 %v82, %v100
    %v119 = vadd.f32 %v83, %v101
    %v120 = vadd.f32 %v84, %v102
    %v121 = vadd.f32 %v85, %v103
    %v122 = vadd.f32 %v86, %v104
    %v123 = vadd.f32 %v87, %v105
    %v124 = vadd.f32 %v88, %v106
    %v125 = vadd.f32 %v89, %v107
    %v126 = vadd.f32 %v90, %v108
    %v127 = vadd.f32 %v91, %v109
    %v128 = vadd.f32 %v92, %v110
    %v129 = vadd.f32 %v93, %v111
    %v130 = vadd.f32 %v94, %v112
    %v131 = vadd.f32 %v113, %v114
    %v132 = vadd.f32 %v131, %v115
    %v133 = vadd.f32 %v132, %v116
    %v134 = vadd.f32 %v133, %v117
    %v135 = vadd.f32 %v134, %v118
    %136 = vadd.xlane.f32.xlu0 %v135
    %v137 = vpop.xlane.xlu0 %136
    %v138 = vadd.f32 %v119, %v120
    %v139 = vadd.f32 %v138, %v121
    %v140 = vadd.f32 %v139, %v122
    %v141 = vadd.f32 %v140, %v123
    %v142 = vadd.f32 %v141, %v124
    %143 = vadd.xlane.f32.xlu0 %v142
    %v144 = vpop.xlane.xlu0 %143
    %vm145 = vcmask 1043456
    %v146 = vsel %vm145, %v125, 0.0
    %v147 = vsel %vm145, %v126, 0.0
    %v148 = vadd.f32 %v146, %v147
    %v149 = vsel %vm145, %v127, 0.0
    %v150 = vadd.f32 %v148, %v149
    %v151 = vsel %vm145, %v128, 0.0
    %v152 = vadd.f32 %v150, %v151
    %v153 = vsel %vm145, %v129, 0.0
    %v154 = vadd.f32 %v152, %v153
    %v155 = vsel %vm145, %v130, 0.0
    %v156 = vadd.f32 %v154, %v155
    %157 = vadd.xlane.f32.xlu0 %v156
    %v158 = vpop.xlane.xlu0 %157
    %v159 = vmul.f32 %v137, 0.0013020834
    %v160 = vmul.f32 %v144, 0.0013020834
    %v161 = vmul.f32 %v158, 0.0013020834
    %v162 = vsub.f32 %v113, %v159
    %v163 = vsub.f32 %v114, %v159
    %v164 = vsub.f32 %v115, %v159
    %v165 = vsub.f32 %v116, %v159
    %v166 = vsub.f32 %v117, %v159
    %v167 = vsub.f32 %v118, %v159
    %v168 = vsub.f32 %v119, %v160
    %v169 = vsub.f32 %v120, %v160
    %v170 = vsub.f32 %v121, %v160
    %v171 = vsub.f32 %v122, %v160
    %v172 = vsub.f32 %v123, %v160
    %v173 = vsub.f32 %v124, %v160
    %v174 = vsub.f32 %v125, %v161
    %v175 = vsub.f32 %v126, %v161
    %v176 = vsub.f32 %v127, %v161
    %v177 = vsub.f32 %v128, %v161
    %v178 = vsub.f32 %v129, %v161
    %v179 = vsub.f32 %v130, %v161
    %v180 = vmul.f32 %v162, %v162
    %v181 = vmul.f32 %v163, %v163
    %v182 = vmul.f32 %v164, %v164
    %v183 = vmul.f32 %v165, %v165
    %v184 = vmul.f32 %v166, %v166
    %v185 = vmul.f32 %v167, %v167
    %v186 = vmul.f32 %v168, %v168
    %v187 = vmul.f32 %v169, %v169
    %v188 = vmul.f32 %v170, %v170
    %v189 = vmul.f32 %v171, %v171
    %v190 = vmul.f32 %v172, %v172
    %v191 = vmul.f32 %v173, %v173
    %v192 = vmul.f32 %v174, %v174
    %v193 = vmul.f32 %v175, %v175
    %v194 = vmul.f32 %v176, %v176
    %v195 = vmul.f32 %v177, %v177
    %v196 = vmul.f32 %v178, %v178
    %v197 = vmul.f32 %v179, %v179
    %v198 = vadd.f32 %v180, %v181
    %v199 = vadd.f32 %v198, %v182
    %v200 = vadd.f32 %v199, %v183
    %v201 = vadd.f32 %v200, %v184
    %v202 = vadd.f32 %v201, %v185
    %203 = vadd.xlane.f32.xlu0 %v202
    %v204 = vpop.xlane.xlu0 %203
    %v205 = vadd.f32 %v186, %v187
    %v206 = vadd.f32 %v205, %v188
    %v207 = vadd.f32 %v206, %v189
    %v208 = vadd.f32 %v207, %v190
    %v209 = vadd.f32 %v208, %v191
    %210 = vadd.xlane.f32.xlu0 %v209
    %v211 = vpop.xlane.xlu0 %210
    %v212 = vsel %vm145, %v192, 0.0
    %v213 = vsel %vm145, %v193, 0.0
    %v214 = vadd.f32 %v212, %v213
    %v215 = vsel %vm145, %v194, 0.0
    %v216 = vadd.f32 %v214, %v215
    %v217 = vsel %vm145, %v195, 0.0
    %v218 = vadd.f32 %v216, %v217
    %v219 = vsel %vm145, %v196, 0.0
    %v220 = vadd.f32 %v218, %v219
    %v221 = vsel %vm145, %v197, 0.0
    %v222 = vadd.f32 %v220, %v221
    %223 = vadd.xlane.f32.xlu0 %v222
    %v224 = vpop.xlane.xlu0 %223
    %v225 = vmul.f32 %v204, 0.0013020834
    %v226 = vmul.f32 %v211, 0.0013020834
    %v227 = vmul.f32 %v224, 0.0013020834
    %v228 = vadd.f32 %v225, 1e-12
    %v229 = vadd.f32 %v226, 1e-12
    %v230 = vadd.f32 %v227, 1e-12
    %v231 = vrsqrt.pop %v228
    %v232 = vmul.f32 %v231, %v228
    %v233 = vmul.f32 %v232, %v231
    %v234 = vmul.f32 0.5, %v233
    %v235 = vsub.f32 1.5, %v234
    %v236 = vmul.f32 %v231, %v235
    %vm237 = vweird.f32 %v228
    %vm238 = vweird.f32 %v231
    %vm239 = vmor %vm237, %vm238
    %v240 = vsel %vm239, %v231, %v236
    %v241 = vrsqrt.pop %v229
    %v242 = vmul.f32 %v241, %v229
    %v243 = vmul.f32 %v242, %v241
    %v244 = vmul.f32 0.5, %v243
    %v245 = vsub.f32 1.5, %v244
    %v246 = vmul.f32 %v241, %v245
    %vm247 = vweird.f32 %v229
    %vm248 = vweird.f32 %v241
    %vm249 = vmor %vm247, %vm248
    %v250 = vsel %vm249, %v241, %v246
    %v251 = vrsqrt.pop %v230
    %v252 = vmul.f32 %v251, %v230
    %v253 = vmul.f32 %v252, %v251
    %v254 = vmul.f32 0.5, %v253
    %v255 = vsub.f32 1.5, %v254
    %v256 = vmul.f32 %v251, %v255
    %vm257 = vweird.f32 %v230
    %vm258 = vweird.f32 %v251
    %vm259 = vmor %vm257, %vm258
    %v260 = vsel %vm259, %v251, %v256
    %v261 = vld [vmem:[#allocation7] sm:$0x3f]
    %v262 = vmul.f32 %v162, %v240
    %v263 = vmul.f32 %v163, %v240
    %v264 = vmul.f32 %v164, %v240
    %v265 = vmul.f32 %v165, %v240
    %v266 = vmul.f32 %v166, %v240
    %v267 = vmul.f32 %v167, %v240
    %v268 = vmul.f32 %v168, %v250
    %v269 = vmul.f32 %v169, %v250
    %v270 = vmul.f32 %v170, %v250
    %v271 = vmul.f32 %v171, %v250
    %v272 = vmul.f32 %v172, %v250
    %v273 = vmul.f32 %v173, %v250
    %v274 = vmul.f32 %v174, %v260
    %v275 = vmul.f32 %v175, %v260
    %v276 = vmul.f32 %v176, %v260
    %v277 = vmul.f32 %v177, %v260
    %v278 = vmul.f32 %v178, %v260
    %v279 = vmul.f32 %v179, %v260
    %v281 = vperm.slane %v261, 0
    %v282 = vperm.slane %v261, 1
    %v283 = vperm.slane %v261, 2
    %v284 = vperm.slane %v261, 3
    %v285 = vperm.slane %v261, 4
    %v286 = vperm.slane %v261, 5
    %v293 = vmul.f32 %v281, %v262
    %v294 = vmul.f32 %v282, %v263
    %v295 = vmul.f32 %v283, %v264
    %v296 = vmul.f32 %v284, %v265
    %v297 = vmul.f32 %v285, %v266
    %v298 = vmul.f32 %v286, %v267
    %v299 = vmul.f32 %v281, %v268
    %v300 = vmul.f32 %v282, %v269
    %v301 = vmul.f32 %v283, %v270
    %v302 = vmul.f32 %v284, %v271
    %v303 = vmul.f32 %v285, %v272
    %v304 = vmul.f32 %v286, %v273
    %v305 = vmul.f32 %v281, %v274
    %v306 = vmul.f32 %v282, %v275
    %v307 = vmul.f32 %v283, %v276
    %v308 = vmul.f32 %v284, %v277
    %v309 = vmul.f32 %v285, %v278
    %v310 = vmul.f32 %v286, %v279
    %v311 = vld [vmem:[#allocation8] sm:$0x3f]
    %v313 = vperm.slane %v311, 0
    %v314 = vperm.slane %v311, 1
    %v315 = vperm.slane %v311, 2
    %v316 = vperm.slane %v311, 3
    %v317 = vperm.slane %v311, 4
    %v318 = vperm.slane %v311, 5
    %v325 = vadd.f32 %v293, %v313
    %v326 = vadd.f32 %v294, %v314
    %v327 = vadd.f32 %v295, %v315
    %v328 = vadd.f32 %v296, %v316
    %v329 = vadd.f32 %v297, %v317
    %v330 = vadd.f32 %v298, %v318
    %v331 = vadd.f32 %v299, %v313
    %v332 = vadd.f32 %v300, %v314
    %v333 = vadd.f32 %v301, %v315
    %v334 = vadd.f32 %v302, %v316
    %v335 = vadd.f32 %v303, %v317
    %v336 = vadd.f32 %v304, %v318
    %v337 = vadd.f32 %v305, %v313
    %v338 = vadd.f32 %v306, %v314
    %v339 = vadd.f32 %v307, %v315
    %v340 = vadd.f32 %v308, %v316
    %v341 = vadd.f32 %v309, %v317
    %v342 = vadd.f32 %v310, %v318
    %343 = vst [vmem:[#allocation10] sm:$0xff] %v325
    %344 = vst [vmem:[#allocation10 + $0x8] sm:$0xff] %v326
    %345 = vst [vmem:[#allocation10 + $0x10] sm:$0xff] %v327
    %346 = vst [vmem:[#allocation10 + $0x18] sm:$0xff] %v328
    %347 = vst [vmem:[#allocation10 + $0x20] sm:$0xff] %v329
    %348 = vst [vmem:[#allocation10 + $0x28] sm:$0xff] %v330
    %349 = vst [vmem:[#allocation10 + $0x30] sm:$0xff] %v331
    %350 = vst [vmem:[#allocation10 + $0x38] sm:$0xff] %v332
    %351 = vst [vmem:[#allocation10 + $0x40] sm:$0xff] %v333
    %352 = vst [vmem:[#allocation10 + $0x48] sm:$0xff] %v334
    %353 = vst [vmem:[#allocation10 + $0x50] sm:$0xff] %v335
    %354 = vst [vmem:[#allocation10 + $0x58] sm:$0xff] %v336
    %355 = vst [vmem:[#allocation10 + $0x60] sm:$0xf] %v337
    %356 = vst [vmem:[#allocation10 + $0x68] sm:$0xf] %v338
    %357 = vst [vmem:[#allocation10 + $0x70] sm:$0xf] %v339
    %358 = vst [vmem:[#allocation10 + $0x78] sm:$0xf] %v340
    %359 = vst [vmem:[#allocation10 + $0x80] sm:$0xf] %v341
    %360 = vst [vmem:[#allocation10 + $0x88] sm:$0xf] %v342
    // Predicated region
    $region34: #{tpu_custom_call.1} parent=1 // pred_check
      _
    $region35: #{tpu_custom_call.1} parent=1 // pred_check_branch
      %362 = sbr.rel (0) target = $region37
    $region36: #{tpu_custom_call.1} parent=1 // pred_region
      %364 = vsyncadd [#allocation4], 0
      %s365 = sshll.u32 [#allocation10], 4
      %s366 = int_to_ptr.vmem [resolvable:$true] %s365
      %s367 = sshll.u32 %s4, 4
      %s368 = int_to_ptr.hbm [resolvable:$true] %s367
      %373 = dma.vmem_to_hbm [thread:$0]  %s366, 2304, %s368, [#allocation4], 768, 768, 48
    $region37: #{tpu_custom_call.1} parent=1 // pred_fallthru
      _
    // Predicated region
    $region38: #{tpu_custom_call.1} parent=1 // pred_check
      _
    $region39: #{tpu_custom_call.1} parent=1 // pred_check_branch
      %375 = sbr.rel (0) target = $region41
    $region40: #{tpu_custom_call.1} parent=1 // pred_region
      %377 = dma.done [#allocation4], 2304
    $region41: #{tpu_custom_call.1} parent=1 // pred_fallthru
      _
    %378 = vsyncpa [#allocation3], 1
    %379 = vsyncpa [#allocation6], 1
    %380 = vsyncpa [#allocation9], 1
    %381 = vsyncpa [#allocation4], 1

</llo_original>
